<compile_context>
chip_gen: v7x
topology: tpu7x:2x2x1
jax: 0.10.0
libtpu: 0.0.40
codegen_flags: <defaults>
</compile_context>

<pallas_src>
import functools

import jax
import jax.numpy as jnp
from jax.experimental import pallas as pl
from jax.experimental.pallas import tpu as pltpu


def _round_up(x, m):
    return (x + m - 1) // m * m


def mlp_kernel(x_ref, w1_ref, b1_ref, w2_ref, b2_ref, w3_ref, b3_ref, o_ref,
               *, compute_dtype):
    # x tile: (TB, F). Weights are already in compute_dtype (bf16) and stay
    # VMEM-resident across grid steps; biases are f32 (1, out) rows.
    x = x_ref[...].astype(compute_dtype)

    # layer 1: Linear + ReLU (MXU matmul, f32 accumulate, f32 epilogue)
    h1 = jnp.dot(x, w1_ref[...], preferred_element_type=jnp.float32) + b1_ref[...]
    h1 = jnp.maximum(h1, 0.0)

    # layer 2: Linear + ReLU
    h2 = jnp.dot(h1.astype(compute_dtype), w2_ref[...],
                 preferred_element_type=jnp.float32) + b2_ref[...]
    h2 = jnp.maximum(h2, 0.0)

    # layer 3: Linear (output columns padded to a lane-dense multiple of 128)
    out = jnp.dot(h2.astype(compute_dtype), w3_ref[...],
                  preferred_element_type=jnp.float32) + b3_ref[...]
    o_ref[...] = out.astype(o_ref.dtype)


def multi_class_model(x, params, *, block_b=512, compute_dtype=jnp.bfloat16):
    """x: (B, input_features) f32. params: W1,b1,W2,b2,W3,b3 with W stored (in, out)."""
    w1, b1, w2, b2, w3, b3 = (params[k] for k in ("W1", "b1", "W2", "b2", "W3", "b3"))
    B, F = x.shape
    H1 = w1.shape[1]
    H2 = w2.shape[1]
    N = w3.shape[1]

    # ---- lane-dense output: pad last layer's output columns to 128k ----
    n_pad = _round_up(N, 128)
    if n_pad != N:
        w3 = jnp.pad(w3, ((0, 0), (0, n_pad - N)))   # zero cols -> exact slice later
        b3 = jnp.pad(b3, ((0, 0), (0, n_pad - N)))

    # ---- pre-cast weights to the MXU dtype once (resident, not per-step) ----
    w1c = w1.astype(compute_dtype)
    w2c = w2.astype(compute_dtype)
    w3c = w3.astype(compute_dtype)
    b1f = b1.astype(jnp.float32)
    b2f = b2.astype(jnp.float32)
    b3f = b3.astype(jnp.float32)

    # ---- batch tiling: TB rows / grid step, multiple of 8 sublanes ----
    tb = max(8, min(_round_up(block_b, 8), _round_up(B, 8)))
    b_pad = _round_up(B, tb)
    if b_pad != B:
        x = jnp.pad(x, ((0, b_pad - B), (0, 0)))
    grid = (b_pad // tb,)

    # ---- VMEM budget: raise the scoped limit only when actually needed ----
    wbytes = jnp.dtype(compute_dtype).itemsize
    resident = wbytes * (F * H1 + H1 * H2 + H2 * n_pad) + 4 * (H1 + H2 + n_pad)
    streamed = 2 * 4 * (tb * F + tb * n_pad)          # double-buffered x / out tiles
    activations = 4 * tb * (H1 + H2 + n_pad)          # h1 / h2 / out working set
    need = resident + streamed + activations
    vmem_limit = None
    if need > 16 * 1024 * 1024:
        vmem_limit = min(int(need * 3 // 2), 100 * 1024 * 1024)

    kernel = functools.partial(mlp_kernel, compute_dtype=compute_dtype)

    def const_spec(arr):
        return pl.BlockSpec(arr.shape, lambda i: (0, 0))

    flops = 2 * b_pad * (F * H1 + H1 * H2 + H2 * n_pad)
    bytes_accessed = (4 * (b_pad * F + b_pad * n_pad + H1 + H2 + n_pad)
                      + wbytes * (F * H1 + H1 * H2 + H2 * n_pad))

    out = pl.pallas_call(
        kernel,
        out_shape=jax.ShapeDtypeStruct((b_pad, n_pad), x.dtype),
        grid=grid,
        in_specs=[
            pl.BlockSpec((tb, F), lambda i: (i, 0)),   # x: streamed batch tile
            const_spec(w1c), const_spec(b1f),          # weights/biases: VMEM-resident
            const_spec(w2c), const_spec(b2f),
            const_spec(w3c), const_spec(b3f),
        ],
        out_specs=pl.BlockSpec((tb, n_pad), lambda i: (i, 0)),
        compiler_params=pltpu.CompilerParams(
            dimension_semantics=("parallel",),         # megacore-shard batch axis
            vmem_limit_bytes=vmem_limit,
        ),
        cost_estimate=pl.CostEstimate(
            flops=flops, transcendentals=0, bytes_accessed=bytes_accessed),
    )(x, w1c, b1f, w2c, b2f, w3c, b3f)

    return out[:B, :N]


def init_params(key, input_features, output_features, hidden_units):
    """Deterministic init mimicking PyTorch Linear (out, in), transposed to (in, out)."""
    ks = jax.random.split(key, 6)

    def linear(kw, kb, fan_in, fan_out):
        bound = 1.0 / jnp.sqrt(fan_in)
        w_torch = jax.random.uniform(kw, (fan_out, fan_in), jnp.float32, -bound, bound)
        b = jax.random.uniform(kb, (1, fan_out), jnp.float32, -bound, bound)
        return w_torch.T, b  # store as (in, out) for x @ W

    W1, b1 = linear(ks[0], ks[1], input_features, hidden_units)
    W2, b2 = linear(ks[2], ks[3], hidden_units, hidden_units)
    W3, b3 = linear(ks[4], ks[5], hidden_units, output_features)
    return {"W1": W1, "b1": b1, "W2": W2, "b2": b2, "W3": W3, "b3": b3}


def reference_f32(x, p):
    h1 = jnp.maximum(x @ p["W1"] + p["b1"], 0.0)
    h2 = jnp.maximum(h1 @ p["W2"] + p["b2"], 0.0)
    return h2 @ p["W3"] + p["b3"]


if __name__ == "__main__":
    key = jax.random.PRNGKey(0)
    k_x, k_p, k_x2 = jax.random.split(key, 3)

    batch = 8
    input_features = 16
    hidden_units = 32
    output_features = 4

    x = jax.random.normal(k_x, (batch, input_features), jnp.float32)
    params = init_params(k_p, input_features, output_features, hidden_units)

    out = jax.block_until_ready(multi_class_model(x, params))
    ref = reference_f32(x, params)
    assert out.shape == (batch, output_features)
    # bf16 MXU operands with f32 accumulation -> loosened tolerance vs f32 reference.
    assert jnp.allclose(out, ref, atol=2e-2, rtol=2e-2), (
        float(jnp.max(jnp.abs(out - ref))))

    # Second check: exercises a multi-step batch grid, batch padding, and the
    # lane-dense output slice with a non-multiple-of-tile batch.
    x2 = jax.random.normal(k_x2, (200, input_features), jnp.float32)
    out2 = jax.block_until_ready(multi_class_model(x2, params, block_b=64))
    ref2 = reference_f32(x2, params)
    assert out2.shape == (200, output_features)
    assert jnp.allclose(out2, ref2, atol=2e-2, rtol=2e-2), (
        float(jnp.max(jnp.abs(out2 - ref2))))

    print("KERNEL_OK")
</pallas_src>

<mosaic_0001>
module attributes {stable_mosaic.version = 11 : i64} {
  func.func @mlp_kernel(%arg0: i32, %arg1: memref<8x16xf32, #tpu.memory_space<vmem>>, %arg2: memref<16x32xbf16, #tpu.memory_space<vmem>>, %arg3: memref<1x32xf32, #tpu.memory_space<vmem>>, %arg4: memref<32x32xbf16, #tpu.memory_space<vmem>>, %arg5: memref<1x32xf32, #tpu.memory_space<vmem>>, %arg6: memref<32x128xbf16, #tpu.memory_space<vmem>>, %arg7: memref<1x128xf32, #tpu.memory_space<vmem>>, %arg8: memref<8x128xf32, #tpu.memory_space<vmem>>) attributes {dimension_semantics = [#tpu.dimension_semantics<parallel>], iteration_bounds = array<i64: 1>, scalar_prefetch = 0 : i64, scratch_operands = 0 : i64, tpu.core_type = #tpu.core_type<tc>, window_params = [{transform_indices = @transform_0, window_bounds = array<i64: 8, 16>}, {pipeline_mode = #tpu.pipeline_mode<synchronous>, transform_indices = @transform_1, window_bounds = array<i64: 16, 32>}, {pipeline_mode = #tpu.pipeline_mode<synchronous>, transform_indices = @transform_2, window_bounds = array<i64: 1, 32>}, {pipeline_mode = #tpu.pipeline_mode<synchronous>, transform_indices = @transform_3, window_bounds = array<i64: 32, 32>}, {pipeline_mode = #tpu.pipeline_mode<synchronous>, transform_indices = @transform_4, window_bounds = array<i64: 1, 32>}, {pipeline_mode = #tpu.pipeline_mode<synchronous>, transform_indices = @transform_5, window_bounds = array<i64: 32, 128>}, {pipeline_mode = #tpu.pipeline_mode<synchronous>, transform_indices = @transform_6, window_bounds = array<i64: 1, 128>}, {transform_indices = @transform_7, window_bounds = array<i64: 8, 128>}]} {
    %c0 = arith.constant 0 : index
    %c0_0 = arith.constant 0 : index
    %0 = vector.load %arg1[%c0, %c0_0] : memref<8x16xf32, #tpu.memory_space<vmem>>, vector<8x16xf32>
    %1 = arith.truncf %0 : vector<8x16xf32> to vector<8x16xbf16>
    %c0_1 = arith.constant 0 : index
    %c0_2 = arith.constant 0 : index
    %2 = vector.load %arg2[%c0_1, %c0_2] : memref<16x32xbf16, #tpu.memory_space<vmem>>, vector<16x32xbf16>
    %cst = arith.constant dense<0.000000e+00> : vector<8x32xf32>
    %3 = tpu.matmul %1, %2, %cst {dimension_numbers = #tpu.dot_dimension_numbers<[1], [0], [0], [1], [0, 0, 1, 1], [], []>} : vector<8x16xbf16>, vector<16x32xbf16>, vector<8x32xf32> -> vector<8x32xf32>
    %c0_3 = arith.constant 0 : index
    %c0_4 = arith.constant 0 : index
    %4 = vector.load %arg3[%c0_3, %c0_4] : memref<1x32xf32, #tpu.memory_space<vmem>>, vector<1x32xf32>
    %5 = vector.broadcast %4 : vector<1x32xf32> to vector<8x32xf32>
    %6 = arith.addf %3, %5 : vector<8x32xf32>
    %cst_5 = arith.constant 0.000000e+00 : f32
    %7 = vector.broadcast %cst_5 : f32 to vector<8x32xf32>
    %8 = arith.maximumf %6, %7 : vector<8x32xf32>
    %9 = arith.truncf %8 : vector<8x32xf32> to vector<8x32xbf16>
    %c0_6 = arith.constant 0 : index
    %c0_7 = arith.constant 0 : index
    %10 = vector.load %arg4[%c0_6, %c0_7] : memref<32x32xbf16, #tpu.memory_space<vmem>>, vector<32x32xbf16>
    %cst_8 = arith.constant dense<0.000000e+00> : vector<8x32xf32>
    %11 = tpu.matmul %9, %10, %cst_8 {dimension_numbers = #tpu.dot_dimension_numbers<[1], [0], [0], [1], [0, 0, 1, 1], [], []>} : vector<8x32xbf16>, vector<32x32xbf16>, vector<8x32xf32> -> vector<8x32xf32>
    %c0_9 = arith.constant 0 : index
    %c0_10 = arith.constant 0 : index
    %12 = vector.load %arg5[%c0_9, %c0_10] : memref<1x32xf32, #tpu.memory_space<vmem>>, vector<1x32xf32>
    %13 = vector.broadcast %12 : vector<1x32xf32> to vector<8x32xf32>
    %14 = arith.addf %11, %13 : vector<8x32xf32>
    %cst_11 = arith.constant 0.000000e+00 : f32
    %15 = vector.broadcast %cst_11 : f32 to vector<8x32xf32>
    %16 = arith.maximumf %14, %15 : vector<8x32xf32>
    %17 = arith.truncf %16 : vector<8x32xf32> to vector<8x32xbf16>
    %c0_12 = arith.constant 0 : index
    %c0_13 = arith.constant 0 : index
    %18 = vector.load %arg6[%c0_12, %c0_13] : memref<32x128xbf16, #tpu.memory_space<vmem>>, vector<32x128xbf16>
    %cst_14 = arith.constant dense<0.000000e+00> : vector<8x128xf32>
    %19 = tpu.matmul %17, %18, %cst_14 {dimension_numbers = #tpu.dot_dimension_numbers<[1], [0], [0], [1], [0, 0, 1, 1], [], []>} : vector<8x32xbf16>, vector<32x128xbf16>, vector<8x128xf32> -> vector<8x128xf32>
    %c0_15 = arith.constant 0 : index
    %c0_16 = arith.constant 0 : index
    %20 = vector.load %arg7[%c0_15, %c0_16] : memref<1x128xf32, #tpu.memory_space<vmem>>, vector<1x128xf32>
    %21 = vector.broadcast %20 : vector<1x128xf32> to vector<8x128xf32>
    %22 = arith.addf %19, %21 : vector<8x128xf32>
    %c0_17 = arith.constant 0 : index
    %c0_18 = arith.constant 0 : index
    %23 = vector.load %arg8[%c0_17, %c0_18] : memref<8x128xf32, #tpu.memory_space<vmem>>, vector<8x128xf32>
    tpu.vector_store %arg8[%c0_17, %c0_18], %22 {strides = array<i32>} : memref<8x128xf32, #tpu.memory_space<vmem>>, vector<8x128xf32>,
    return
  }
  func.func @transform_0(%arg0: i32) -> (i32, i32) {
    %c0_i32 = arith.constant 0 : i32
    %c0_i32_0 = arith.constant 0 : i32
    return %arg0, %c0_i32 : i32, i32
  }
  func.func @transform_1(%arg0: i32) -> (i32, i32) {
    %c0_i32 = arith.constant 0 : i32
    %c0_i32_0 = arith.constant 0 : i32
    %c0_i32_1 = arith.constant 0 : i32
    return %c0_i32, %c0_i32_0 : i32, i32
  }
  func.func @transform_2(%arg0: i32) -> (i32, i32) {
    %c0_i32 = arith.constant 0 : i32
    %c0_i32_0 = arith.constant 0 : i32
    %c0_i32_1 = arith.constant 0 : i32
    return %c0_i32, %c0_i32_0 : i32, i32
  }
  func.func @transform_3(%arg0: i32) -> (i32, i32) {
    %c0_i32 = arith.constant 0 : i32
    %c0_i32_0 = arith.constant 0 : i32
    %c0_i32_1 = arith.constant 0 : i32
    return %c0_i32, %c0_i32_0 : i32, i32
  }
  func.func @transform_4(%arg0: i32) -> (i32, i32) {
    %c0_i32 = arith.constant 0 : i32
    %c0_i32_0 = arith.constant 0 : i32
    %c0_i32_1 = arith.constant 0 : i32
    return %c0_i32, %c0_i32_0 : i32, i32
  }
  func.func @transform_5(%arg0: i32) -> (i32, i32) {
    %c0_i32 = arith.constant 0 : i32
    %c0_i32_0 = arith.constant 0 : i32
    %c0_i32_1 = arith.constant 0 : i32
    return %c0_i32, %c0_i32_0 : i32, i32
  }
  func.func @transform_6(%arg0: i32) -> (i32, i32) {
    %c0_i32 = arith.constant 0 : i32
    %c0_i32_0 = arith.constant 0 : i32
    %c0_i32_1 = arith.constant 0 : i32
    return %c0_i32, %c0_i32_0 : i32, i32
  }
  func.func @transform_7(%arg0: i32) -> (i32, i32) {
    %c0_i32 = arith.constant 0 : i32
    %c0_i32_0 = arith.constant 0 : i32
    return %arg0, %c0_i32 : i32, i32
  }
}

</mosaic_0001>

<llo_original>
// kernel: tpu_custom_call.1
$region0: #{tpu_custom_call.1}
  #allocation0 [shape = 'u32[]', space=smem, size = 0x4, offset = 0x4, fixed_abs, tag = 'smem constant byte address 0x4 - core index']
  #allocation1 [shape = 'u32[144,128]{1,0:T(1,128)}', space=vmem, size = 0x12000, scoped, tag = 'internal scratch']
  %s0 = inlined_call_operand.hbm [shape: f32[8,16], index: 0, kind: input, shape index: {}]
  %s1 = inlined_call_operand.hbm [shape: bf16[16,32], index: 1, kind: input, shape index: {}]
  %s2 = inlined_call_operand.vmem [shape: f32[1,32], index: 2, kind: input, shape index: {}]
  %s3 = inlined_call_operand.hbm [shape: bf16[32,32], index: 3, kind: input, shape index: {}]
  %s4 = inlined_call_operand.vmem [shape: f32[1,32], index: 4, kind: input, shape index: {}]
  %s5 = inlined_call_operand.vmem [shape: bf16[32,128], index: 5, kind: input, shape index: {}]
  %s6 = inlined_call_operand.vmem [shape: f32[1,128], index: 6, kind: input, shape index: {}]
  %s7 = inlined_call_operand.hbm [shape: f32[8,128], index: 7, kind: output, shape index: {}]
  %s8 = sld [smem:[#allocation0]]
  $region50: #{tpu_custom_call.1} parent=0
    _
  %s10 = ssub.s32 1, %s8
  %s11 = scalar_select 0, %s10, %s8
  $region1: #{tpu_custom_call.1} parent=0
    #allocation2 [shape = 'u8[4096]{0}', space=vmem, size = 0x1000, scoped, tag = 'input window, operand 0, single buffered']
    #allocation3 [shape = 's32[1]{0}', space=sflag, size = 0x4, scoped, tag = 'scoped memory for tpu_custom_call.1']
    #allocation4 [shape = 's32[1]{0}', space=sflag, size = 0x4, scoped, tag = 'scoped memory for tpu_custom_call.1']
    #allocation5 [shape = 'u8[4096]{0}', space=vmem, size = 0x1000, scoped, tag = 'input window, operand 1, single buffered']
    #allocation6 [shape = 's32[1]{0}', space=sflag, size = 0x4, scoped, tag = 'scoped memory for tpu_custom_call.1']
    #allocation7 [shape = 'u8[8192]{0}', space=vmem, size = 0x2000, scoped, tag = 'input window, operand 3, single buffered']
    #allocation8 [shape = 'u8[4096]{0}', space=vmem, size = 0x1000, scoped, tag = 'output window, operand 0, single buffered']
    %12 = vsyncpa [#allocation3], 0
    %13 = vsyncpa [#allocation6], 0
    %14 = vsyncpa [#allocation4], 0
    // Predicated region
    $region2: #{tpu_custom_call.1} parent=1 // pred_check
      _
    $region3: #{tpu_custom_call.1} parent=1 // pred_check_branch
      %16 = sbr.rel (0) target = $region5
    $region4: #{tpu_custom_call.1} parent=1 // pred_region
      %s18 = ssub.s32 128, 128
      %19 = vsyncadd [#allocation3], %s18
      %s21 = sshll.u32 [#allocation2], 4
      %s22 = int_to_ptr.vmem [resolvable:$true] %s21
      %24 = dma.hbm_to_vmem [thread:$0]  %s0, 128, %s22, [#allocation3]
    $region5: #{tpu_custom_call.1} parent=1 // pred_fallthru
      _
    // Predicated region
    $region6: #{tpu_custom_call.1} parent=1 // pred_check
      _
    $region7: #{tpu_custom_call.1} parent=1 // pred_check_branch
      %26 = sbr.rel (0) target = $region9
    $region8: #{tpu_custom_call.1} parent=1 // pred_region
      %s28 = ssub.s32 128, 128
      %29 = vsyncadd [#allocation6], %s28
      %s30 = sshll.u32 [#allocation5], 4
      %s31 = int_to_ptr.vmem [resolvable:$true] %s30
      %36 = dma.hbm_to_vmem [thread:$0]  %s1, 128, %s31, [#allocation6], 64, 64, 4
    $region9: #{tpu_custom_call.1} parent=1 // pred_fallthru
      _
    // Predicated region
    $region10: #{tpu_custom_call.1} parent=1 // pred_check
      _
    $region11: #{tpu_custom_call.1} parent=1 // pred_check_branch
      %38 = sbr.rel (0) target = $region13
    $region12: #{tpu_custom_call.1} parent=1 // pred_region
      _
    $region13: #{tpu_custom_call.1} parent=1 // pred_fallthru
      _
    // Predicated region
    $region14: #{tpu_custom_call.1} parent=1 // pred_check
      _
    $region15: #{tpu_custom_call.1} parent=1 // pred_check_branch
      %40 = sbr.rel (0) target = $region17
    $region16: #{tpu_custom_call.1} parent=1 // pred_region
      %s42 = ssub.s32 256, 256
      %43 = vsyncadd [#allocation6], %s42
      %s44 = sshll.u32 [#allocation7], 4
      %s45 = int_to_ptr.vmem [resolvable:$true] %s44
      %50 = dma.hbm_to_vmem [thread:$0]  %s3, 256, %s45, [#allocation6], 64, 64, 4
    $region17: #{tpu_custom_call.1} parent=1 // pred_fallthru
      _
    // Predicated region
    $region18: #{tpu_custom_call.1} parent=1 // pred_check
      _
    $region19: #{tpu_custom_call.1} parent=1 // pred_check_branch
      %52 = sbr.rel (0) target = $region21
    $region20: #{tpu_custom_call.1} parent=1 // pred_region
      _
    $region21: #{tpu_custom_call.1} parent=1 // pred_fallthru
      _
    // Predicated region
    $region22: #{tpu_custom_call.1} parent=1 // pred_check
      _
    $region23: #{tpu_custom_call.1} parent=1 // pred_check_branch
      %54 = sbr.rel (0) target = $region25
    $region24: #{tpu_custom_call.1} parent=1 // pred_region
      _
    $region25: #{tpu_custom_call.1} parent=1 // pred_fallthru
      _
    // Predicated region
    $region26: #{tpu_custom_call.1} parent=1 // pred_check
      _
    $region27: #{tpu_custom_call.1} parent=1 // pred_check_branch
      %56 = sbr.rel (0) target = $region29
    $region28: #{tpu_custom_call.1} parent=1 // pred_region
      _
    $region29: #{tpu_custom_call.1} parent=1 // pred_fallthru
      _
    // Predicated region
    $region30: #{tpu_custom_call.1} parent=1 // pred_check
      _
    $region31: #{tpu_custom_call.1} parent=1 // pred_check_branch
      %58 = sbr.rel (0) target = $region33
    $region32: #{tpu_custom_call.1} parent=1 // pred_region
      %59 = dma.done [#allocation3], 128
    $region33: #{tpu_custom_call.1} parent=1 // pred_fallthru
      _
    // Predicated region
    $region34: #{tpu_custom_call.1} parent=1 // pred_check
      _
    $region35: #{tpu_custom_call.1} parent=1 // pred_check_branch
      %61 = sbr.rel (0) target = $region37
    $region36: #{tpu_custom_call.1} parent=1 // pred_region
      %62 = dma.done [#allocation6], 128
    $region37: #{tpu_custom_call.1} parent=1 // pred_fallthru
      _
    // Predicated region
    $region38: #{tpu_custom_call.1} parent=1 // pred_check
      _
    $region39: #{tpu_custom_call.1} parent=1 // pred_check_branch
      %64 = sbr.rel (0) target = $region41
    $region40: #{tpu_custom_call.1} parent=1 // pred_region
      %65 = dma.done [#allocation6], 256
    $region41: #{tpu_custom_call.1} parent=1 // pred_fallthru
      _
    %v67 = vld [vmem:[#allocation2] sm:$0xff]
    %v68 = vpack.c.bf16 %v67, %v67
    %v69 = vld [vmem:[#allocation5] sm:$0xf]
    %v70 = vld [vmem:[#allocation5 + $0x4] sm:$0xf]
    %v71 = vld [vmem:[%s2] sm:$0x1]
    %v73 = vlaneseq
    %v74 = vshrl.u32 %v73, 7
    %v75 = vsub.s32 0, %v74
    %v76 = vrot.slane %v71, %v75
    %v80 = vunpack.c.l.b16 %v69
    %v81 = vunpack.c.l.b16 %v70
    %v82 = vpack.c.b16 %v81, %v80
    %vm84 = vcmask 130048
    %v86 = vsel %vm84, %v68, 0
    %88 = vmatprep.subr.bf16.mxu0 0
    %89 = vmatpush1.bf16.msra.mxu0 %v82
    %90 = vmatprep.subr.bf16.mxu0 0
    %91 = vmatpush1.bf16.msra.mxu0 0
    %92 = vmatprep.subr.bf16.mxu0 0
    %93 = vmatpush1.bf16.msra.mxu0 0
    %94 = vmatprep.subr.bf16.mxu0 0
    %95 = vmatpush1.bf16.msra.mxu0 0
    %96 = vmatprep.subr.bf16.mxu0 0
    %97 = vmatpush1.bf16.msra.mxu0 0
    %98 = vmatprep.subr.bf16.mxu0 0
    %99 = vmatpush1.bf16.msra.mxu0 0
    %100 = vmatprep.subr.bf16.mxu0 0
    %101 = vmatpush1.bf16.msra.mxu0 0
    %102 = vmatprep.subr.bf16.mxu0 0
    %103 = vmatpush1.bf16.msra.mxu0 0
    %104 = vmatprep.subr.bf16.mxu0 0
    %105 = vmatpush1.bf16.msra.mxu0 0
    %106 = vmatprep.subr.bf16.mxu0 0
    %107 = vmatpush1.bf16.msra.mxu0 0
    %108 = vmatprep.subr.bf16.mxu0 0
    %109 = vmatpush1.bf16.msra.mxu0 0
    %110 = vmatprep.subr.bf16.mxu0 0
    %111 = vmatpush1.bf16.msra.mxu0 0
    %112 = vmatprep.subr.bf16.mxu0 0
    %113 = vmatpush1.bf16.msra.mxu0 0
    %114 = vmatprep.subr.bf16.mxu0 0
    %115 = vmatpush1.bf16.msra.mxu0 0
    %116 = vmatprep.subr.bf16.mxu0 0
    %117 = vmatpush1.bf16.msra.mxu0 0
    %118 = vmatprep.subr.bf16.mxu0 0
    %119 = vmatpush1.bf16.msra.mxu0 0
    %120 = vmatprep.mubr.bf16.mxu0 0
    %121 = vmatmul.mubr.bf16.gmra.mrb[0].mxu0 %v86
    %v122 = vpop.f32.mrb[0].mxu0
    %v123 = vadd.f32 %v76, %v122
    %v124 = vpop.f32.mrb[0].mxu0
    %v125 = vpop.f32.mrb[0].mxu0
    %v126 = vpop.f32.mrb[0].mxu0
    %127 = vdwg.mxu0
    %v128 = vmax.f32 %v123, 0.0
    %v129 = vpack.c.bf16 %v128, %v128
    %v130 = vld [vmem:[#allocation7] sm:$0xf]
    %v131 = vld [vmem:[#allocation7 + $0x4] sm:$0xf]
    %v132 = vld [vmem:[#allocation7 + $0x8] sm:$0xf]
    %v133 = vld [vmem:[#allocation7 + $0xc] sm:$0xf]
    %v134 = vld [vmem:[%s4] sm:$0x1]
    %v136 = vlaneseq
    %v137 = vshrl.u32 %v136, 7
    %v138 = vsub.s32 0, %v137
    %v139 = vrot.slane %v134, %v138
    %v145 = vunpack.c.l.b16 %v130
    %v146 = vunpack.c.l.b16 %v131
    %v147 = vunpack.c.l.b16 %v132
    %v148 = vunpack.c.l.b16 %v133
    %v149 = vpack.c.b16 %v146, %v145
    %v150 = vpack.c.b16 %v148, %v147
    %vm153 = vcmask 261120
    %v155 = vsel %vm153, %v129, 0
    %157 = vmatprep.subr.bf16.mxu0 0
    %158 = vmatpush1.bf16.msra.mxu0 %v149
    %159 = vmatprep.subr.bf16.mxu0 0
    %160 = vmatpush1.bf16.msra.mxu0 %v150
    %161 = vmatprep.subr.bf16.mxu0 0
    %162 = vmatpush1.bf16.msra.mxu0 0
    %163 = vmatprep.subr.bf16.mxu0 0
    %164 = vmatpush1.bf16.msra.mxu0 0
    %165 = vmatprep.subr.bf16.mxu0 0
    %166 = vmatpush1.bf16.msra.mxu0 0
    %167 = vmatprep.subr.bf16.mxu0 0
    %168 = vmatpush1.bf16.msra.mxu0 0
    %169 = vmatprep.subr.bf16.mxu0 0
    %170 = vmatpush1.bf16.msra.mxu0 0
    %171 = vmatprep.subr.bf16.mxu0 0
    %172 = vmatpush1.bf16.msra.mxu0 0
    %173 = vmatprep.subr.bf16.mxu0 0
    %174 = vmatpush1.bf16.msra.mxu0 0
    %175 = vmatprep.subr.bf16.mxu0 0
    %176 = vmatpush1.bf16.msra.mxu0 0
    %177 = vmatprep.subr.bf16.mxu0 0
    %178 = vmatpush1.bf16.msra.mxu0 0
    %179 = vmatprep.subr.bf16.mxu0 0
    %180 = vmatpush1.bf16.msra.mxu0 0
    %181 = vmatprep.subr.bf16.mxu0 0
    %182 = vmatpush1.bf16.msra.mxu0 0
    %183 = vmatprep.subr.bf16.mxu0 0
    %184 = vmatpush1.bf16.msra.mxu0 0
    %185 = vmatprep.subr.bf16.mxu0 0
    %186 = vmatpush1.bf16.msra.mxu0 0
    %187 = vmatprep.subr.bf16.mxu0 0
    %188 = vmatpush1.bf16.msra.mxu0 0
    %189 = vmatprep.mubr.bf16.mxu0 0
    %190 = vmatmul.mubr.bf16.gmra.mrb[0].mxu0 %v155
    %v191 = vpop.f32.mrb[0].mxu0
    %v192 = vadd.f32 %v139, %v191
    %v193 = vpop.f32.mrb[0].mxu0
    %v194 = vpop.f32.mrb[0].mxu0
    %v195 = vpop.f32.mrb[0].mxu0
    %196 = vdwg.mxu0
    %v197 = vmax.f32 %v192, 0.0
    %v198 = vpack.c.bf16 %v197, %v197
    %v199 = vld [vmem:[%s5] sm:$0xf]
    %v200 = vld [vmem:[%s5 + $0x4] sm:$0xf]
    %v201 = vld [vmem:[%s5 + $0x8] sm:$0xf]
    %v202 = vld [vmem:[%s5 + $0xc] sm:$0xf]
    %v203 = vld [vmem:[%s6] sm:$0x1]
    %v205 = vlaneseq
    %v206 = vshrl.u32 %v205, 7
    %v207 = vsub.s32 0, %v206
    %v208 = vrot.slane %v203, %v207
    %v214 = vunpack.c.l.b16 %v199
    %v215 = vunpack.c.l.b16 %v200
    %v216 = vunpack.c.l.b16 %v201
    %v217 = vunpack.c.l.b16 %v202
    %v218 = vpack.c.b16 %v215, %v214
    %v219 = vpack.c.b16 %v217, %v216
    %v223 = vsel %vm153, %v198, 0
    %225 = vmatprep.subr.bf16.mxu0 0
    %226 = vmatpush1.bf16.msra.mxu0 %v218
    %227 = vmatprep.subr.bf16.mxu0 0
    %228 = vmatpush1.bf16.msra.mxu0 %v219
    %229 = vmatprep.subr.bf16.mxu0 0
    %230 = vmatpush1.bf16.msra.mxu0 0
    %231 = vmatprep.subr.bf16.mxu0 0
    %232 = vmatpush1.bf16.msra.mxu0 0
    %233 = vmatprep.subr.bf16.mxu0 0
    %234 = vmatpush1.bf16.msra.mxu0 0
    %235 = vmatprep.subr.bf16.mxu0 0
    %236 = vmatpush1.bf16.msra.mxu0 0
    %237 = vmatprep.subr.bf16.mxu0 0
    %238 = vmatpush1.bf16.msra.mxu0 0
    %239 = vmatprep.subr.bf16.mxu0 0
    %240 = vmatpush1.bf16.msra.mxu0 0
    %241 = vmatprep.subr.bf16.mxu0 0
    %242 = vmatpush1.bf16.msra.mxu0 0
    %243 = vmatprep.subr.bf16.mxu0 0
    %244 = vmatpush1.bf16.msra.mxu0 0
    %245 = vmatprep.subr.bf16.mxu0 0
    %246 = vmatpush1.bf16.msra.mxu0 0
    %247 = vmatprep.subr.bf16.mxu0 0
    %248 = vmatpush1.bf16.msra.mxu0 0
    %249 = vmatprep.subr.bf16.mxu0 0
    %250 = vmatpush1.bf16.msra.mxu0 0
    %251 = vmatprep.subr.bf16.mxu0 0
    %252 = vmatpush1.bf16.msra.mxu0 0
    %253 = vmatprep.subr.bf16.mxu0 0
    %254 = vmatpush1.bf16.msra.mxu0 0
    %255 = vmatprep.subr.bf16.mxu0 0
    %256 = vmatpush1.bf16.msra.mxu0 0
    %257 = vmatprep.mubr.bf16.mxu0 0
    %258 = vmatmul.mubr.bf16.gmra.mrb[0].mxu0 %v223
    %v259 = vpop.f32.mrb[0].mxu0
    %v260 = vadd.f32 %v208, %v259
    %v261 = vpop.f32.mrb[0].mxu0
    %v262 = vpop.f32.mrb[0].mxu0
    %v263 = vpop.f32.mrb[0].mxu0
    %264 = vdwg.mxu0
    %265 = vst [vmem:[#allocation8] sm:$0xff] %v260
    // Predicated region
    $region42: #{tpu_custom_call.1} parent=1 // pred_check
      _
    $region43: #{tpu_custom_call.1} parent=1 // pred_check_branch
      %267 = sbr.rel (0) target = $region45
    $region44: #{tpu_custom_call.1} parent=1 // pred_region
      %s269 = ssub.s32 128, 128
      %270 = vsyncadd [#allocation4], %s269
      %s272 = sshll.u32 [#allocation8], 4
      %s273 = int_to_ptr.vmem [resolvable:$true] %s272
      %275 = dma.vmem_to_hbm [thread:$0]  %s273, 128, %s7, [#allocation4]
    $region45: #{tpu_custom_call.1} parent=1 // pred_fallthru
      _
    // Predicated region
    $region46: #{tpu_custom_call.1} parent=1 // pred_check
      _
    $region47: #{tpu_custom_call.1} parent=1 // pred_check_branch
      %277 = sbr.rel (0) target = $region49
    $region48: #{tpu_custom_call.1} parent=1 // pred_region
      %278 = dma.done [#allocation4], 128
    $region49: #{tpu_custom_call.1} parent=1 // pred_fallthru
      _
    %279 = vsyncpa [#allocation3], 1
    %280 = vsyncpa [#allocation6], 1
    %281 = vsyncpa [#allocation4], 1

</llo_original>
